<compile_context>
chip_gen: v7x
topology: tpu7x:2x2x1
jax: 0.10.0
libtpu: 0.0.40
codegen_flags: <defaults>
</compile_context>

<pallas_src>
import functools

import jax
import jax.numpy as jnp
from jax.experimental import pallas as pl
from jax.experimental.pallas import tpu as pltpu

_LANE = 128
_SUBLANE = 8
_NEG_BIG = -1e30            # finite "-inf" used to mask out-of-range class columns
_MAX_CHUNK_C = 2048         # columns per in-kernel compute chunk (bounds temporaries)
_MAX_TILE_N = 256           # rows per block (bounds per-chunk temporaries / scratch)
_BLOCK_BUDGET = 8 << 20     # ~8 MiB of logits per pipeline buffer


def _round_up(x, m):
    return ((x + m - 1) // m) * m


def _cdiv(a, b):
    return (a + b - 1) // b


def _ce_kernel(logits_ref, targets_ref, out_ref, m_sc, l_sc, t_sc, *,
               n_true, n_classes, tile_n, tile_c, chunk_c,
               ragged_rows, ragged_cols, single_step, compute_dtype):
    i = pl.program_id(0)          # batch tile   ("parallel" -> megacore shardable)
    j = pl.program_id(1)          # class tile   (reduction axis, last in grid)

    tgt = targets_ref[...]        # (tile_n, 1) int32
    neg_big = jnp.asarray(_NEG_BIG, dtype=compute_dtype)
    num_chunks = tile_c // chunk_c

    def chunk_stats(start):
        """Masked logits chunk, its per-row max (f32) and target-logit partial (f32)."""
        x = logits_ref[:, start:start + chunk_c].astype(compute_dtype)  # static slice
        lane = jax.lax.broadcasted_iota(jnp.int32, (tile_n, chunk_c), 1)
        col0 = j * tile_c + start                                       # scalar offset
        if ragged_cols:
            # Clamp columns beyond C (DMA pad region is undefined) before max/exp.
            x = jnp.where(lane < n_classes - col0, x, neg_big)
        blk_max = jnp.max(x, axis=-1, keepdims=True).astype(jnp.float32)
        # Target gather: chunk-local iota vs (tgt - col0); only a (tile_n,1) subtract.
        hit = lane == (tgt - col0)
        t_part = jnp.sum(jnp.where(hit, x, jnp.asarray(0, dtype=x.dtype))
                         .astype(jnp.float32), axis=-1, keepdims=True)
        return x, blk_max, t_part

    def write_partial(per_example):
        if ragged_rows:
            row = i * tile_n + jax.lax.broadcasted_iota(
                jnp.int32, per_example.shape, 0)
            per_example = jnp.where(row < n_true, per_example, 0.0)
        partial = jnp.sum(per_example)
        # One lane-dense (8,128) tile per batch tile; wrapper reads [:, 0, 0].
        out_ref[...] = jnp.full(out_ref.shape, partial, dtype=jnp.float32)

    if single_step:
        # num_c == 1 and a single chunk: plain logsumexp, no online rescale / scratch RMW.
        x, blk_max, t_part = chunk_stats(0)
        p = jnp.exp(x - blk_max.astype(compute_dtype))
        p_sum = jnp.sum(p.astype(jnp.float32), axis=-1, keepdims=True)
        write_partial(blk_max + jnp.log(p_sum) - t_part)
    else:
        @pl.when(j == 0)
        def _():
            m_sc[...] = jnp.full_like(m_sc, -jnp.inf)
            l_sc[...] = jnp.zeros_like(l_sc)
            t_sc[...] = jnp.zeros_like(t_sc)

        # Static chunk walk over the (large) class tile: per-chunk cast/exp temporaries
        # die at the scratch writes, so the DMA block can stay big without VMEM blowup.
        for ci in range(num_chunks):
            x, blk_max, t_part = chunk_stats(ci * chunk_c)
            m_new = jnp.maximum(m_sc[...], blk_max)                    # (tile_n,1) f32
            p = jnp.exp(x - m_new.astype(compute_dtype))               # bulk elementwise
            p_sum = jnp.sum(p.astype(jnp.float32), axis=-1, keepdims=True)
            alpha = jnp.exp(m_sc[...] - m_new)                         # tiny, EUP
            l_sc[...] = alpha * l_sc[...] + p_sum
            m_sc[...] = m_new
            t_sc[...] = t_sc[...] + t_part

        @pl.when(j == pl.num_programs(1) - 1)
        def _():
            lse = m_sc[...] + jnp.log(l_sc[...])
            write_partial(lse - t_sc[...])


def cross_entropy_pallas(logits, targets, *, tile_n=None, tile_c=None, chunk_c=None):
    """logits: (N, C) floats; targets: (N,) integer class ids -> scalar f32 mean CE."""
    n, c = logits.shape
    itemsize = jnp.dtype(logits.dtype).itemsize
    # bf16 inputs: keep bulk elementwise/exp in bf16 (native VPU/EUP on v6e/v7x); f32 acc.
    # TODO(synk): v5e has no bf16 VPU/EUP — Mosaic upcasts there (correct, just no win).
    compute_dtype = jnp.bfloat16 if logits.dtype == jnp.bfloat16 else jnp.float32

    # ---- lane-dense class tile / in-kernel compute chunk ----
    c128 = _round_up(c, _LANE)
    if tile_c is None:
        # Widest lane-dense class tile that still leaves >= 8 rows inside the budget.
        fit_c = max(_LANE, (_BLOCK_BUDGET // (_SUBLANE * itemsize)) // _LANE * _LANE)
        tile_c = min(c128, fit_c, 16 * _MAX_CHUNK_C)
    tile_c = max(_LANE, _round_up(tile_c, _LANE))
    if chunk_c is None:
        chunk_c = min(tile_c, _MAX_CHUNK_C)
    chunk_c = min(max(_LANE, _round_up(chunk_c, _LANE)), tile_c)
    if tile_c % chunk_c:
        tile_c = _round_up(tile_c, chunk_c)      # keep the static chunk walk exact

    # ---- batch tile: fill the per-buffer budget; >= 2 tiles for v7x megacore ----
    if tile_n is None:
        tile_n = (_BLOCK_BUDGET // (tile_c * itemsize)) // _SUBLANE * _SUBLANE
        tile_n = int(min(max(tile_n, _SUBLANE), _MAX_TILE_N, _round_up(n, _SUBLANE)))
        if _cdiv(n, tile_n) == 1 and n > _SUBLANE:
            tile_n = _round_up(_cdiv(n, 2), _SUBLANE)
    tile_n = max(_SUBLANE, _round_up(tile_n, _SUBLANE))

    num_n = _cdiv(n, tile_n)
    num_c = _cdiv(c, tile_c)
    ragged_rows = (n % tile_n) != 0
    ragged_cols = (c % tile_c) != 0
    single_step = (num_c == 1) and (tile_c == chunk_c)

    targets_2d = targets.astype(jnp.int32).reshape(n, 1)    # no padding anywhere

    # Explicit scoped-VMEM limit: ~70% of this chip's capacity
    # (v7x 64 MiB/TC -> ~45 MiB; v5e/v6e 128 MiB -> capped at 100 MiB).
    try:
        vmem_cap = int(pltpu.get_tpu_info().vmem_capacity_bytes)
    except Exception:
        vmem_cap = 64 << 20      # assume the most constrained generation (v7x)
    vmem_limit = max(32 << 20, min(int(vmem_cap * 0.7), 100 << 20))

    kernel = functools.partial(
        _ce_kernel, n_true=n, n_classes=c, tile_n=tile_n, tile_c=tile_c,
        chunk_c=chunk_c, ragged_rows=ragged_rows, ragged_cols=ragged_cols,
        single_step=single_step, compute_dtype=compute_dtype)

    cost = pl.CostEstimate(
        flops=int(5 * n * c),
        transcendentals=int(n * c),
        bytes_accessed=int(n * c * itemsize + n * 4 + num_n * _SUBLANE * _LANE * 4))

    partials = pl.pallas_call(
        kernel,
        out_shape=jax.ShapeDtypeStruct((num_n, _SUBLANE, _LANE), jnp.float32),
        grid_spec=pltpu.PrefetchScalarGridSpec(
            num_scalar_prefetch=0,
            grid=(num_n, num_c),
            in_specs=[
                pl.BlockSpec((tile_n, tile_c), lambda i, j: (i, j)),
                pl.BlockSpec((tile_n, 1), lambda i, j: (i, 0)),
            ],
            out_specs=pl.BlockSpec((1, _SUBLANE, _LANE), lambda i, j: (i, 0, 0)),
            scratch_shapes=[
                pltpu.VMEM((tile_n, 1), jnp.float32),   # running max m
                pltpu.VMEM((tile_n, 1), jnp.float32),   # running sum l
                pltpu.VMEM((tile_n, 1), jnp.float32),   # target-logit accumulator
            ],
        ),
        compiler_params=pltpu.CompilerParams(
            dimension_semantics=("parallel", "arbitrary"),
            vmem_limit_bytes=vmem_limit),
        cost_estimate=cost,
    )(logits, targets_2d)

    # Tiny final reduction over per-batch-tile partial sums (negligible work).
    return jnp.sum(partials[:, 0, 0]) / jnp.float32(n)


if __name__ == "__main__":
    key = jax.random.PRNGKey(0)
    k1, k2, k3, k4, k5, k6 = jax.random.split(key, 6)

    def ref_ce(logits, targets):
        lg = logits.astype(jnp.float32)
        lse = jax.scipy.special.logsumexp(lg, axis=-1)
        tl = jnp.take_along_axis(lg, targets.reshape(-1, 1).astype(jnp.int32),
                                 axis=-1)[:, 0]
        return jnp.mean(lse - tl)

    # Case 1: small shapes consistent with the module (batch=8, classes=32); fast path.
    N, C = 8, 32
    logits = jax.random.normal(k1, (N, C), dtype=jnp.float32)
    targets = jax.random.randint(k2, (N,), 0, C, dtype=jnp.int32)
    loss = cross_entropy_pallas(logits, targets)
    jax.block_until_ready(loss)
    assert jnp.allclose(loss, ref_ce(logits, targets), atol=1e-5, rtol=1e-5), (
        loss, ref_ce(logits, targets))

    # Case 2: multi class-tile grid (online logsumexp across grid steps) + ragged
    # row/column tails handled in-kernel with no wrapper padding (N=20, C=200).
    N2, C2 = 20, 200
    logits2 = jax.random.normal(k3, (N2, C2), dtype=jnp.float32)
    targets2 = jax.random.randint(k4, (N2,), 0, C2, dtype=jnp.int32)
    loss2 = cross_entropy_pallas(logits2, targets2, tile_n=8, tile_c=128)
    jax.block_until_ready(loss2)
    assert jnp.allclose(loss2, ref_ce(logits2, targets2), atol=1e-5, rtol=1e-5), (
        loss2, ref_ce(logits2, targets2))

    # Case 3: chunked in-kernel walk of a wider class tile (tile_c=256, chunk_c=128).
    loss3 = cross_entropy_pallas(logits2, targets2, tile_n=16, tile_c=256, chunk_c=128)
    jax.block_until_ready(loss3)
    assert jnp.allclose(loss3, ref_ce(logits2, targets2), atol=1e-5, rtol=1e-5), (
        loss3, ref_ce(logits2, targets2))

    # Case 4: bf16 input -> bf16 elementwise/exp path (f32 accumulators), plus the
    # automatic batch-tile split for megacore (N=24 -> 2 batch tiles).
    N4, C4 = 24, 200
    logits4 = jax.random.normal(k5, (N4, C4), dtype=jnp.float32).astype(jnp.bfloat16)
    targets4 = jax.random.randint(k6, (N4,), 0, C4, dtype=jnp.int32)
    loss4 = cross_entropy_pallas(logits4, targets4)
    jax.block_until_ready(loss4)
    assert jnp.allclose(loss4, ref_ce(logits4, targets4), atol=5e-2, rtol=2e-2), (
        loss4, ref_ce(logits4, targets4))

    print("KERNEL_OK")
</pallas_src>

<mosaic_0001>
module attributes {stable_mosaic.version = 11 : i64} {
  func.func @_ce_kernel(%arg0: i32, %arg1: i32, %arg2: memref<8x128xf32, #tpu.memory_space<vmem>>, %arg3: memref<8x1xi32, #tpu.memory_space<vmem>>, %arg4: memref<1x8x128xf32, #tpu.memory_space<vmem>>, %arg5: memref<8x1xf32, #tpu.memory_space<vmem>>, %arg6: memref<8x1xf32, #tpu.memory_space<vmem>>, %arg7: memref<8x1xf32, #tpu.memory_space<vmem>>) attributes {dimension_semantics = [#tpu.dimension_semantics<parallel>, #tpu.dimension_semantics<arbitrary>], iteration_bounds = array<i64: 1, 1>, scalar_prefetch = 0 : i64, scratch_operands = 3 : i64, tpu.core_type = #tpu.core_type<tc>, window_params = [{transform_indices = @transform_0, window_bounds = array<i64: 8, 128>}, {transform_indices = @transform_1, window_bounds = array<i64: 8, 1>}, {transform_indices = @transform_2, window_bounds = array<i64: 1, 8, 128>}]} {
    %c0 = arith.constant 0 : index
    %c0_0 = arith.constant 0 : index
    %0 = vector.load %arg3[%c0, %c0_0] : memref<8x1xi32, #tpu.memory_space<vmem>>, vector<8x1xi32>
    %c0_1 = arith.constant 0 : index
    %c0_2 = arith.constant 0 : index
    %1 = vector.load %arg2[%c0_1, %c0_2] : memref<8x128xf32, #tpu.memory_space<vmem>>, vector<8x128xf32>
    %2 = tpu.iota {dimensions = array<i32: 1>} : vector<8x128xi32>
    %c128_i32 = arith.constant 128 : i32
    %3 = arith.muli %arg1, %c128_i32 : i32
    %c0_i32 = arith.constant 0 : i32
    %4 = arith.addi %3, %c0_i32 : i32
    %c32_i32 = arith.constant 32 : i32
    %5 = arith.subi %c32_i32, %4 : i32
    %6 = vector.broadcast %5 : i32 to vector<8x128xi32>
    %7 = arith.cmpi slt, %2, %6 : vector<8x128xi32>
    %cst = arith.constant -1.000000e+30 : f32
    %8 = vector.broadcast %cst : f32 to vector<8x128xf32>
    %9 = arith.select %7, %1, %8 : vector<8x128xi1>, vector<8x128xf32>
    %cst_3 = arith.constant dense<0xFF800000> : vector<8xf32>
    %10 = vector.multi_reduction <maximumf>, %9, %cst_3 [1] : vector<8x128xf32> to vector<8xf32>
    %11 = vector.shape_cast %10 : vector<8xf32> to vector<8x1xf32>
    %12 = vector.broadcast %4 : i32 to vector<8x1xi32>
    %13 = arith.subi %0, %12 : vector<8x1xi32>
    %14 = vector.broadcast %13 : vector<8x1xi32> to vector<8x128xi32>
    %15 = arith.cmpi eq, %2, %14 : vector<8x128xi32>
    %cst_4 = arith.constant 0.000000e+00 : f32
    %16 = vector.broadcast %cst_4 : f32 to vector<8x128xf32>
    %17 = arith.select %15, %9, %16 : vector<8x128xi1>, vector<8x128xf32>
    %cst_5 = arith.constant dense<0.000000e+00> : vector<8xf32>
    %18 = vector.multi_reduction <add>, %17, %cst_5 [1] : vector<8x128xf32> to vector<8xf32>
    %19 = vector.shape_cast %18 : vector<8xf32> to vector<8x1xf32>
    %20 = vector.broadcast %11 : vector<8x1xf32> to vector<8x128xf32>
    %21 = arith.subf %9, %20 : vector<8x128xf32>
    %22 = math.exp %21 : vector<8x128xf32>
    %cst_6 = arith.constant dense<0.000000e+00> : vector<8xf32>
    %23 = vector.multi_reduction <add>, %22, %cst_6 [1] : vector<8x128xf32> to vector<8xf32>
    %24 = vector.shape_cast %23 : vector<8xf32> to vector<8x1xf32>
    %25 = math.log %24 : vector<8x1xf32>
    %26 = arith.addf %11, %25 : vector<8x1xf32>
    %27 = arith.subf %26, %19 : vector<8x1xf32>
    %28 = vector.shape_cast %27 : vector<8x1xf32> to vector<1x8x1xf32>
    %cst_7 = arith.constant dense<0.000000e+00> : vector<1xf32>
    %29 = vector.multi_reduction <add>, %28, %cst_7 [1, 2] : vector<1x8x1xf32> to vector<1xf32>
    %30 = vector.shape_cast %29 : vector<1xf32> to vector<1x1x1xf32>
    %31 = vector.extract %30[0, 0, 0] : f32 from vector<1x1x1xf32>
    %32 = vector.broadcast %31 : f32 to vector<1x8x128xf32>
    %c0_8 = arith.constant 0 : index
    %c0_9 = arith.constant 0 : index
    %c0_10 = arith.constant 0 : index
    %33 = vector.load %arg4[%c0_8, %c0_9, %c0_10] : memref<1x8x128xf32, #tpu.memory_space<vmem>>, vector<1x8x128xf32>
    tpu.vector_store %arg4[%c0_8, %c0_9, %c0_10], %32 {strides = array<i32>} : memref<1x8x128xf32, #tpu.memory_space<vmem>>, vector<1x8x128xf32>,
    return
  }
  func.func @transform_0(%arg0: i32, %arg1: i32) -> (i32, i32) {
    %c0_i32 = arith.constant 0 : i32
    return %arg0, %arg1 : i32, i32
  }
  func.func @transform_1(%arg0: i32, %arg1: i32) -> (i32, i32) {
    %c0_i32 = arith.constant 0 : i32
    %c0_i32_0 = arith.constant 0 : i32
    return %arg0, %c0_i32 : i32, i32
  }
  func.func @transform_2(%arg0: i32, %arg1: i32) -> (i32, i32, i32) {
    %c0_i32 = arith.constant 0 : i32
    %c0_i32_0 = arith.constant 0 : i32
    %c0_i32_1 = arith.constant 0 : i32
    return %arg0, %c0_i32, %c0_i32_0 : i32, i32, i32
  }
}

</mosaic_0001>

<llo_original>
// kernel: tpu_custom_call.1
$region0: #{tpu_custom_call.1}
  #allocation0 [shape = 'u32[]', space=smem, size = 0x4, offset = 0x4, fixed_abs, tag = 'smem constant byte address 0x4 - core index']
  #allocation1 [shape = 'u32[144,128]{1,0:T(1,128)}', space=vmem, size = 0x12000, scoped, tag = 'internal scratch']
  #allocation2 [shape = 'f32[8,1]{1,0:T(8,128)}', space=vmem, size = 0x1000, scoped, tag = 'scratch operand']
  #allocation3 [shape = 'f32[8,1]{1,0:T(8,128)}', space=vmem, size = 0x1000, scoped, tag = 'scratch operand']
  #allocation4 [shape = 'f32[8,1]{1,0:T(8,128)}', space=vmem, size = 0x1000, scoped, tag = 'scratch operand']
  %s0 = inlined_call_operand.vmem [shape: f32[8,32], index: 0, kind: input, shape index: {}]
  %s1 = inlined_call_operand.vmem [shape: s32[8,1], index: 1, kind: input, shape index: {}]
  %s2 = inlined_call_operand.hbm [shape: f32[1,8,128], index: 2, kind: output, shape index: {}]
  %s3 = sld [smem:[#allocation0]]
  $region18: #{tpu_custom_call.1} parent=0
    _
  %s5 = ssub.s32 1, %s3
  %s6 = scalar_select 0, %s5, %s3
  $region1: #{tpu_custom_call.1} parent=0
    #allocation5 [shape = 'u8[4096]{0}', space=vmem, size = 0x1000, scoped, tag = 'output window, operand 0, single buffered']
    #allocation6 [shape = 's32[1]{0}', space=sflag, size = 0x4, scoped, tag = 'scoped memory for tpu_custom_call.1']
    %7 = vsyncpa [#allocation6], 0
    // Predicated region
    $region2: #{tpu_custom_call.1} parent=1 // pred_check
      _
    $region3: #{tpu_custom_call.1} parent=1 // pred_check_branch
      %9 = sbr.rel (0) target = $region5
    $region4: #{tpu_custom_call.1} parent=1 // pred_region
      _
    $region5: #{tpu_custom_call.1} parent=1 // pred_fallthru
      _
    // Predicated region
    $region6: #{tpu_custom_call.1} parent=1 // pred_check
      _
    $region7: #{tpu_custom_call.1} parent=1 // pred_check_branch
      %11 = sbr.rel (0) target = $region9
    $region8: #{tpu_custom_call.1} parent=1 // pred_region
      _
    $region9: #{tpu_custom_call.1} parent=1 // pred_fallthru
      _
    %v12 = vld [vmem:[%s1] sm:$0xff]
    %v13 = vld [vmem:[%s0] sm:$0xff]
    %v14 = vlaneseq
    %v15 = vand.u32 %v14, 127
    %s16 = smul.u32 0, 128
    %s17 = ssub.s32 32, %s16
    %v18 = vstv %s17
    %vm19 = vcmp.lt.s32.totalorder %v15, %v18
    %v20 = vsel %vm19, %v13, -1e+30
    %21 = vmax.xlane.f32.xlu0 %v20
    %v22 = vpop.xlane.xlu0 %21
    %v23 = vstv %s16
    %v24 = vsub.s32 %v12, %v23
    %25 = vset.pattern.permute.xlu0 0
    %26 = vperm.xlu0 %25, %v24
    %v27 = vpop.permute.xlu0 %26
    %vm28 = vcmp.eq.s32.totalorder %v15, %v27
    %v29 = vsel %vm28, %v20, 0.0
    %30 = vadd.xlane.f32.xlu0 %v29
    %v31 = vpop.xlane.xlu0 %30
    %v32 = vsub.f32 %v20, %v22
    %v33 = vmul.f32 %v32, 1.442695
    %v34 = vpow.pop %v33
    %35 = vadd.xlane.f32.xlu0 %v34
    %v36 = vpop.xlane.xlu0 %35
    %v37 = vlog2.pop %v36
    %v38 = vmul.f32 %v37, 0.6931472
    %v39 = vadd.f32 %v22, %v38
    %v40 = vsub.f32 %v39, %v31
    %vm41 = vcmask 7168
    %v42 = vsel %vm41, %v40, 0.0
    %43 = vadd.xlane.f32.xlu0 %v42
    %v44 = vpop.xlane.xlu0 %43
    %v45 = vrot.slane %v44, 4
    %v46 = vadd.f32 %v44, %v45
    %v47 = vrot.slane %v46, 2
    %v48 = vadd.f32 %v46, %v47
    %v49 = vrot.slane %v48, 1
    %v50 = vadd.f32 %v48, %v49
    %s51 = vtos %v50
    %v52 = vstv %s51
    %53 = vst [vmem:[#allocation5] sm:$0xff] %v52
    // Predicated region
    $region10: #{tpu_custom_call.1} parent=1 // pred_check
      _
    $region11: #{tpu_custom_call.1} parent=1 // pred_check_branch
      %55 = sbr.rel (0) target = $region13
    $region12: #{tpu_custom_call.1} parent=1 // pred_region
      %s57 = ssub.s32 128, 128
      %58 = vsyncadd [#allocation6], %s57
      %s60 = sshll.u32 [#allocation5], 4
      %s61 = int_to_ptr.vmem [resolvable:$true] %s60
      %63 = dma.vmem_to_hbm [thread:$0]  %s61, 128, %s2, [#allocation6]
    $region13: #{tpu_custom_call.1} parent=1 // pred_fallthru
      _
    // Predicated region
    $region14: #{tpu_custom_call.1} parent=1 // pred_check
      _
    $region15: #{tpu_custom_call.1} parent=1 // pred_check_branch
      %65 = sbr.rel (0) target = $region17
    $region16: #{tpu_custom_call.1} parent=1 // pred_region
      %66 = dma.done [#allocation6], 128
    $region17: #{tpu_custom_call.1} parent=1 // pred_fallthru
      _
    %67 = vsyncpa [#allocation6], 1

</llo_original>
